<compile_context>
chip_gen: v5e
topology: v5e:2x2
jax: 0.10.0
libtpu: 0.0.40
codegen_flags: <defaults>
</compile_context>

<pallas_src>
import jax
import jax.numpy as jnp
from jax.experimental import pallas as pl
from jax.experimental.pallas import tpu as pltpu

LANES = 128  # batch elements per packed row (lane width)


def perceptron_kernel(w_ref, b_ref, x_ref, o_ref):
    """One batch tile.

    w_ref : SMEM (2,)              f32  -- Linear weight, flattened [w00, w01]
    b_ref : SMEM (1,)              f32  -- Linear bias
    x_ref : VMEM (2, rb, 128)      f32/bf16 -- feature-major, sublane-packed
    o_ref : VMEM (rb, 128)         f32  -- lane-dense, sublane-packed output
    """
    w0 = w_ref[0]
    w1 = w_ref[1]
    b = b_ref[0]

    x0 = x_ref[0].astype(jnp.float32)  # (rb, 128) full-vreg slab
    x1 = x_ref[1].astype(jnp.float32)  # (rb, 128)

    # Linear(2, 1): two VPU FMAs instead of an MXU round-trip.
    z = x0 * w0 + x1 * w1 + b

    # Sigmoid: exp -> EUP, approx reciprocal -> EUP (VALU stays nearly free).
    o_ref[...] = pl.reciprocal(1.0 + jnp.exp(-z), approx=True)


def perceptron2_forward_feature_major(x_fm, weight, bias, *, tile_rows=4096):
    """Feature-major entry point (no extra HBM passes).

    x_fm  : (2, B) -- row 0 = feature 0, row 1 = feature 1 (f32 or bf16)
    weight: (1, 2) f32 (PyTorch Linear layout)
    bias  : (1,)   f32
    Returns (B, 1) f32.
    """
    assert x_fm.shape[0] == 2
    B = x_fm.shape[1]

    w = weight.reshape(-1).astype(jnp.float32)  # (2,)
    b = bias.reshape(-1).astype(jnp.float32)    # (1,)

    # Pad only up to the 128-lane row quantum (no-op when already aligned).
    pb = pl.cdiv(B, LANES) * LANES
    if pb != B:
        x_fm = jnp.pad(x_fm, ((0, 0), (0, pb - B)))

    R = pb // LANES
    x3 = x_fm.reshape(2, R, LANES)  # zero-copy packed view: (2, R, 128)

    # Tile rows: as large as the VMEM budget allows; ragged last block is fine.
    rb = min(int(tile_rows), R)
    if rb < R:
        rb = max(8, (rb // 8) * 8)
    grid = (pl.cdiv(R, rb),)

    out = pl.pallas_call(
        perceptron_kernel,
        out_shape=jax.ShapeDtypeStruct((R, LANES), jnp.float32),
        grid=grid,
        in_specs=[
            pl.BlockSpec(memory_space=pltpu.SMEM),            # weight (2,)
            pl.BlockSpec(memory_space=pltpu.SMEM),            # bias   (1,)
            pl.BlockSpec((2, rb, LANES), lambda i: (0, i, 0)),  # packed input
        ],
        out_specs=pl.BlockSpec((rb, LANES), lambda i: (i, 0)),  # packed output
        compiler_params=pltpu.CompilerParams(
            dimension_semantics=("parallel",),   # shards across TCs on v7x
            vmem_limit_bytes=32 * 1024 * 1024,   # portable scoped-VMEM budget
        ),
        cost_estimate=pl.CostEstimate(
            flops=4 * pb,            # 2 mul + 2 add per element
            transcendentals=pb,      # exp per element
            bytes_accessed=12 * pb,  # 8 B in + 4 B out per element
        ),
    )(w, b, x3)

    out = out.reshape(pb)
    if pb != B:
        out = out[:B]
    return out.reshape(B, 1)


def perceptron2_forward(x, weight, bias, *, tile_rows=4096):
    """PyTorch-layout entry point.  x: (B, 2); returns (B, 1) f32.

    The single x.T below is the only extra HBM pass; producers that can hand
    over feature-major (2, B) data should call
    `perceptron2_forward_feature_major` directly and avoid it.
    """
    return perceptron2_forward_feature_major(
        x.T, weight, bias, tile_rows=tile_rows)


def reference_forward(x, weight, bias):
    return jax.nn.sigmoid(x.astype(jnp.float32) @ weight.T + bias)


if __name__ == "__main__":
    key = jax.random.PRNGKey(0)
    kx, kw, kb = jax.random.split(key, 3)

    # Deterministic parameter init (PyTorch Linear style: U(-1/sqrt(fan_in), +)).
    bound = 1.0 / jnp.sqrt(2.0)
    weight = jax.random.uniform(kw, (1, 2), jnp.float32, -bound, bound)
    bias = jax.random.uniform(kb, (1,), jnp.float32, -bound, bound)

    # (B, tile_rows) cases:
    #   8    -> unaligned batch (pad-to-128 path), single block
    #   256  -> aligned batch, single block, no padding anywhere
    #   1280 -> aligned batch, grid of 2 with a ragged last block
    for B, trows in ((8, 4096), (256, 4096), (1280, 8)):
        x = jax.random.normal(kx, (B, 2), jnp.float32)

        out = jax.block_until_ready(
            perceptron2_forward(x, weight, bias, tile_rows=trows))
        ref = reference_forward(x, weight, bias)

        assert out.shape == (B, 1)
        # Tolerance covers the EUP approximate reciprocal (~1e-4 relative).
        assert jnp.allclose(out, ref, atol=2e-3, rtol=2e-3), float(
            jnp.max(jnp.abs(out - ref)))

    print("KERNEL_OK")
</pallas_src>

<mosaic_0001>
module attributes {stable_mosaic.version = 11 : i64} {
  func.func @perceptron_kernel(%arg0: i32, %arg1: memref<2xf32, #tpu.memory_space<smem>>, %arg2: memref<1xf32, #tpu.memory_space<smem>>, %arg3: memref<2x1x128xf32, #tpu.memory_space<vmem>>, %arg4: memref<1x128xf32, #tpu.memory_space<vmem>>) attributes {dimension_semantics = [#tpu.dimension_semantics<parallel>], iteration_bounds = array<i64: 1>, scalar_prefetch = 0 : i64, scratch_operands = 0 : i64, tpu.core_type = #tpu.core_type<tc>, window_params = [{transform_indices = @transform_0, window_bounds = array<i64: 2>}, {transform_indices = @transform_1, window_bounds = array<i64: 1>}, {transform_indices = @transform_2, window_bounds = array<i64: 2, 1, 128>}, {transform_indices = @transform_3, window_bounds = array<i64: 1, 128>}]} {
    %c0 = arith.constant 0 : index
    %0 = memref.load %arg1[%c0] : memref<2xf32, #tpu.memory_space<smem>>
    %c1 = arith.constant 1 : index
    %1 = memref.load %arg1[%c1] : memref<2xf32, #tpu.memory_space<smem>>
    %c0_0 = arith.constant 0 : index
    %2 = memref.load %arg2[%c0_0] : memref<1xf32, #tpu.memory_space<smem>>
    %c0_1 = arith.constant 0 : index
    %c0_2 = arith.constant 0 : index
    %c0_3 = arith.constant 0 : index
    %3 = vector.load %arg3[%c0_1, %c0_2, %c0_3] : memref<2x1x128xf32, #tpu.memory_space<vmem>>, vector<1x1x128xf32>
    %4 = vector.shape_cast %3 : vector<1x1x128xf32> to vector<1x128xf32>
    %c1_4 = arith.constant 1 : index
    %c0_5 = arith.constant 0 : index
    %c0_6 = arith.constant 0 : index
    %5 = vector.load %arg3[%c1_4, %c0_5, %c0_6] : memref<2x1x128xf32, #tpu.memory_space<vmem>>, vector<1x1x128xf32>
    %6 = vector.shape_cast %5 : vector<1x1x128xf32> to vector<1x128xf32>
    %7 = vector.broadcast %0 : f32 to vector<1x128xf32>
    %8 = arith.mulf %4, %7 : vector<1x128xf32>
    %9 = vector.broadcast %1 : f32 to vector<1x128xf32>
    %10 = arith.mulf %6, %9 : vector<1x128xf32>
    %11 = arith.addf %8, %10 : vector<1x128xf32>
    %12 = vector.broadcast %2 : f32 to vector<1x128xf32>
    %13 = arith.addf %11, %12 : vector<1x128xf32>
    %cst = arith.constant 0.000000e+00 : f32
    %14 = vector.broadcast %cst : f32 to vector<1x128xf32>
    %15 = arith.subf %14, %13 : vector<1x128xf32>
    %16 = math.exp %15 : vector<1x128xf32>
    %cst_7 = arith.constant 1.000000e+00 : f32
    %17 = vector.broadcast %cst_7 : f32 to vector<1x128xf32>
    %18 = arith.addf %17, %16 : vector<1x128xf32>
    %19 = tpu.reciprocal %18 {approx = true} : vector<1x128xf32> -> vector<1x128xf32>
    %c0_8 = arith.constant 0 : index
    %c0_9 = arith.constant 0 : index
    %20 = vector.load %arg4[%c0_8, %c0_9] : memref<1x128xf32, #tpu.memory_space<vmem>>, vector<1x128xf32>
    tpu.vector_store %arg4[%c0_8, %c0_9], %19 {strides = array<i32>} : memref<1x128xf32, #tpu.memory_space<vmem>>, vector<1x128xf32>,
    return
  }
  func.func @transform_0(%arg0: i32) -> i32 {
    %c0_i32 = arith.constant 0 : i32
    %c0_i32_0 = arith.constant 0 : i32
    return %c0_i32 : i32
  }
  func.func @transform_1(%arg0: i32) -> i32 {
    %c0_i32 = arith.constant 0 : i32
    %c0_i32_0 = arith.constant 0 : i32
    return %c0_i32 : i32
  }
  func.func @transform_2(%arg0: i32) -> (i32, i32, i32) {
    %c0_i32 = arith.constant 0 : i32
    %c0_i32_0 = arith.constant 0 : i32
    %c0_i32_1 = arith.constant 0 : i32
    return %c0_i32, %arg0, %c0_i32_0 : i32, i32, i32
  }
  func.func @transform_3(%arg0: i32) -> (i32, i32) {
    %c0_i32 = arith.constant 0 : i32
    %c0_i32_0 = arith.constant 0 : i32
    return %arg0, %c0_i32 : i32, i32
  }
}

</mosaic_0001>

<llo_original>
// kernel: tpu_custom_call.1
$region0: #{tpu_custom_call.1}
  #allocation0 [shape = 'u32[]', space=smem, size = 0x4, offset = 0x4, fixed_abs, tag = 'smem constant byte address 0x4 - core index']
  #allocation1 [shape = 'u32[72,128]{1,0:T(1,128)}', space=vmem, size = 0x9000, scoped, tag = 'internal scratch']
  #allocation2 [shape = 'f32[1]{0:T(128)S(6)}', space=smem, size = 0x200, scoped, tag = 'scoped memory for tpu_custom_call.1']
  %s0 = inlined_call_operand.hbm [shape: f32[2], index: 0, kind: input, shape index: {}]
  %s1 = inlined_call_operand.<no memory space> [shape: f32[1], index: 1, kind: input, shape index: {}]
  %s2 = inlined_call_operand.vmem [shape: f32[2,1,128], index: 2, kind: input, shape index: {}]
  %s3 = inlined_call_operand.hbm [shape: f32[1,128], index: 3, kind: output, shape index: {}]
  %s4 = sld [smem:[#allocation0]]
  $region26: #{tpu_custom_call.1} parent=0
    _
  %s6 = ssub.s32 1, %s4
  %s7 = scalar_select 0, %s6, %s4
  %8 = sst [smem:[#allocation2]] %s1
  $region1: #{tpu_custom_call.1} parent=0
    #allocation3 [shape = 'u8[512]{0}', space=smem, size = 0x200, scoped, tag = 'input window, operand 0, single buffered']
    #allocation4 [shape = 's32[1]{0}', space=sflag, size = 0x4, scoped, tag = 'scoped memory for tpu_custom_call.1']
    #allocation5 [shape = 's32[1]{0}', space=sflag, size = 0x4, scoped, tag = 'scoped memory for tpu_custom_call.1']
    #allocation6 [shape = 'u8[512]{0}', space=vmem, size = 0x400, scoped, tag = 'output window, operand 0, single buffered']
    %9 = vsyncpa [#allocation5], 0
    %10 = vsyncpa [#allocation4], 0
    // Predicated region
    $region2: #{tpu_custom_call.1} parent=1 // pred_check
      _
    $region3: #{tpu_custom_call.1} parent=1 // pred_check_branch
      %12 = sbr.rel (0) target = $region5
    $region4: #{tpu_custom_call.1} parent=1 // pred_region
      %14 = vsyncadd [#allocation5], 0
      %s16 = sshll.u32 %s0, 4
      %s17 = int_to_ptr.hbm [resolvable:$true] %s16
      %19 = dma.hbm_to_smem %s17, 16, [#allocation3], [#allocation5]
    $region5: #{tpu_custom_call.1} parent=1 // pred_fallthru
      _
    // Predicated region
    $region6: #{tpu_custom_call.1} parent=1 // pred_check
      _
    $region7: #{tpu_custom_call.1} parent=1 // pred_check_branch
      %21 = sbr.rel (0) target = $region9
    $region8: #{tpu_custom_call.1} parent=1 // pred_region
      _
    $region9: #{tpu_custom_call.1} parent=1 // pred_fallthru
      _
    // Predicated region
    $region10: #{tpu_custom_call.1} parent=1 // pred_check
      _
    $region11: #{tpu_custom_call.1} parent=1 // pred_check_branch
      %23 = sbr.rel (0) target = $region13
    $region12: #{tpu_custom_call.1} parent=1 // pred_region
      _
    $region13: #{tpu_custom_call.1} parent=1 // pred_fallthru
      _
    // Predicated region
    $region14: #{tpu_custom_call.1} parent=1 // pred_check
      _
    $region15: #{tpu_custom_call.1} parent=1 // pred_check_branch
      %25 = sbr.rel (0) target = $region17
    $region16: #{tpu_custom_call.1} parent=1 // pred_region
      %27 = dma.done [#allocation5], 16
    $region17: #{tpu_custom_call.1} parent=1 // pred_fallthru
      _
    %28 = sfence
    %s29 = sld [smem:[#allocation3]]
    %s30 = sld [smem:[#allocation3 + $0x1]]
    %s31 = sld [smem:[#allocation2]]
    %v32 = vld [vmem:[%s2] sm:$0x1]
    %s33 = scalar_lea.vmem %s2, 1
    %v34 = vld [vmem:[%s33] sm:$0x1]
    %v35 = vstv %s29
    %v36 = vmul.f32 %v32, %v35
    %v37 = vstv %s30
    %v38 = vmul.f32 %v34, %v37
    %v39 = vadd.f32 %v36, %v38
    %v40 = vstv %s31
    %v41 = vadd.f32 %v39, %v40
    %v42 = vsub.f32 0.0, %v41
    %v43 = vmul.f32 %v42, 1.442695
    %v44 = vpow.pop %v43
    %v45 = vadd.f32 %v44, 1.0
    %v46 = vrcp.pop %v45
    %47 = vst [vmem:[#allocation6] sm:$0x1] %v46
    // Predicated region
    $region18: #{tpu_custom_call.1} parent=1 // pred_check
      _
    $region19: #{tpu_custom_call.1} parent=1 // pred_check_branch
      %49 = sbr.rel (0) target = $region21
    $region20: #{tpu_custom_call.1} parent=1 // pred_region
      %51 = vsyncadd [#allocation4], 0
      %s53 = sshll.u32 [#allocation6], 4
      %s54 = int_to_ptr.vmem [resolvable:$true] %s53
      %s55 = sshll.u32 %s3, 4
      %s56 = int_to_ptr.hbm [resolvable:$true] %s55
      %58 = dma.vmem_to_hbm [thread:$0]  %s54, 16, %s56, [#allocation4]
    $region21: #{tpu_custom_call.1} parent=1 // pred_fallthru
      _
    // Predicated region
    $region22: #{tpu_custom_call.1} parent=1 // pred_check
      _
    $region23: #{tpu_custom_call.1} parent=1 // pred_check_branch
      %60 = sbr.rel (0) target = $region25
    $region24: #{tpu_custom_call.1} parent=1 // pred_region
      %62 = dma.done [#allocation4], 16
    $region25: #{tpu_custom_call.1} parent=1 // pred_fallthru
      _
    %63 = vsyncpa [#allocation4], 1
    %64 = vsyncpa [#allocation5], 1

</llo_original>
